<compile_context>
chip_gen: v7x
topology: tpu7x:2x2x1
jax: 0.10.0
libtpu: 0.0.40
codegen_flags: <defaults>
</compile_context>

<pallas_src>
import jax
import jax.numpy as jnp
from jax import lax
from jax.experimental import pallas as pl
from jax.experimental.pallas import tpu as pltpu


def _linear_reward_kernel(phi_ref, w_ref, b_ref, o_ref):
    # phi_ref: (tb, D) VMEM   w_ref: (1, D) VMEM (grid-resident)
    # b_ref:   (1,)    SMEM   o_ref: (1, tb) VMEM (lane-dense output row)
    #
    # Contract D on the MXU: (1, D) x (tb, D) -> (1, tb).  Result lands
    # lane-major -> full-width unmasked vst; VPU/XLU stay free.
    y = lax.dot_general(
        w_ref[...], phi_ref[...],
        dimension_numbers=(((1,), (1,)), ((), ())),
        preferred_element_type=jnp.float32,
    )
    y = y + b_ref[0]
    # -relu(-y) == min(y, 0)
    o_ref[...] = jnp.minimum(y, 0.0).astype(o_ref.dtype)


def _vmem_capacity_bytes():
    try:
        info = pltpu.get_tpu_info()
        cap = getattr(info, "vmem_capacity_bytes", None)
        if cap:
            return int(cap)
    except Exception:
        pass
    return 64 * 1024 * 1024  # conservative fallback (v7x per-TC VMEM)


def linear_reward_model(phi, weight, bias, *, block_rows=None):
    """phi: (B, D) f32; weight: (1, D) f32 (torch nn.Linear layout); bias: (1,) f32.

    Returns (B, 1) f32 = min(phi @ weight.T + bias, 0) = -relu(-(phi @ W^T + b)).
    """
    B, D = phi.shape
    dtype = phi.dtype

    # --- per-generation tile sizing (amortize ~0.35 us per grid step) --------
    lanes = pl.cdiv(D, 128) * 128          # VMEM lane padding of the feature dim
    bytes_per_row = lanes * 4              # f32
    vmem_total = _vmem_capacity_bytes()
    budget = int(vmem_total * 0.70)        # headroom for weight/output/misc
    max_rows_vmem = max(128, budget // (2 * bytes_per_row))  # double-buffered phi

    if B <= 128:
        tb = B                              # blocks == full array dims: always legal
    else:
        target = block_rows if block_rows is not None else 8192
        tb = min(target, max_rows_vmem, B)
        # Keep >= 2 grid steps: overlaps DMA with compute and lets v7x's two
        # TensorCores split the batch axis.
        tb = min(tb, pl.cdiv(pl.cdiv(B, 2), 128) * 128)
        tb = max(128, (tb // 128) * 128)    # lane-dense output blocks

    num_tiles = pl.cdiv(B, tb)              # partial last block; no wrapper jnp.pad

    w_row = weight.reshape(1, D).astype(dtype)   # (1, D): VMEM-resident across grid
    b_smem = bias.reshape((1,)).astype(dtype)    # scalar bias in SMEM

    # vmem_limit from the actual tile footprint (+ slack), not a fixed cap.
    tile_bytes = tb * bytes_per_row
    out_tile_bytes = 8 * (pl.cdiv(tb, 128) * 128) * 4
    w_tile_bytes = 8 * lanes * 4
    vmem_limit = 2 * tile_bytes + 2 * out_tile_bytes + 2 * w_tile_bytes + (4 << 20)
    vmem_limit = int(min(max(vmem_limit, 16 << 20), vmem_total * 0.9))

    out_row = pl.pallas_call(
        _linear_reward_kernel,
        out_shape=jax.ShapeDtypeStruct((1, B), dtype),
        grid_spec=pltpu.PrefetchScalarGridSpec(
            num_scalar_prefetch=0,
            grid=(num_tiles,),
            in_specs=[
                pl.BlockSpec((tb, D), lambda i: (i, 0)),            # streamed batch tile
                pl.BlockSpec((1, D), lambda i: (0, 0)),             # weight row, resident
                pl.BlockSpec(memory_space=pltpu.MemorySpace.SMEM),  # bias scalar
            ],
            out_specs=pl.BlockSpec((1, tb), lambda i: (0, i)),      # lane-dense row
        ),
        compiler_params=pltpu.CompilerParams(
            # TODO(synk): on v7x, pltpu.CORE_PARALLEL can be tried to force the
            # 2-TC split; "parallel" is kept as the portable/safe default.
            dimension_semantics=("parallel",),
            vmem_limit_bytes=vmem_limit,
        ),
    )(phi, w_row, b_smem)

    return out_row.reshape(B, 1)


if __name__ == "__main__":
    # Small shapes consistent with the module (phi_dim=32); batch=512 yields a
    # 2-step pipelined grid with the auto-sized tile (tb=256 here).
    B, D = 512, 32
    key = jax.random.PRNGKey(0)
    k_phi, k_w, k_b = jax.random.split(key, 3)

    phi = jax.random.normal(k_phi, (B, D), dtype=jnp.float32)
    # nn.Linear(phi_dim, 1): weight (1, phi_dim), bias (1,).
    weight = jax.random.normal(k_w, (1, D), dtype=jnp.float32) * 0.1
    bias = jax.random.normal(k_b, (1,), dtype=jnp.float32) * 0.1

    out = linear_reward_model(phi, weight, bias)
    out = jax.block_until_ready(out)

    # Reference in plain JAX: -relu(-(phi @ W^T + b)) == min(., 0)
    ref = jnp.minimum(phi @ weight.T + bias, 0.0)
    assert out.shape == (B, 1)
    assert jnp.allclose(out, ref, atol=1e-5, rtol=1e-5), "mismatch vs reference"

    print("KERNEL_OK")
</pallas_src>

<mosaic_0001>
module attributes {stable_mosaic.version = 11 : i64} {
  func.func @_linear_reward_kernel(%arg0: i32, %arg1: memref<256x32xf32, #tpu.memory_space<vmem>>, %arg2: memref<1x32xf32, #tpu.memory_space<vmem>>, %arg3: memref<1xf32, #tpu.memory_space<smem>>, %arg4: memref<1x256xf32, #tpu.memory_space<vmem>>) attributes {dimension_semantics = [#tpu.dimension_semantics<parallel>], iteration_bounds = array<i64: 2>, scalar_prefetch = 0 : i64, scratch_operands = 0 : i64, tpu.core_type = #tpu.core_type<tc>, window_params = [{transform_indices = @transform_0, window_bounds = array<i64: 256, 32>}, {pipeline_mode = #tpu.pipeline_mode<synchronous>, transform_indices = @transform_1, window_bounds = array<i64: 1, 32>}, {transform_indices = @transform_2, window_bounds = array<i64: 1>}, {transform_indices = @transform_3, window_bounds = array<i64: 1, 256>}]} {
    %c0 = arith.constant 0 : index
    %c0_0 = arith.constant 0 : index
    %0 = vector.load %arg2[%c0, %c0_0] : memref<1x32xf32, #tpu.memory_space<vmem>>, vector<1x32xf32>
    %c0_1 = arith.constant 0 : index
    %c0_2 = arith.constant 0 : index
    %1 = vector.load %arg1[%c0_1, %c0_2] : memref<256x32xf32, #tpu.memory_space<vmem>>, vector<256x32xf32>
    %cst = arith.constant dense<0.000000e+00> : vector<1x256xf32>
    %2 = tpu.matmul %0, %1, %cst {dimension_numbers = #tpu.dot_dimension_numbers<[1], [1], [0], [0], [0, 0, 1, 0], [], []>} : vector<1x32xf32>, vector<256x32xf32>, vector<1x256xf32> -> vector<1x256xf32>
    %c0_3 = arith.constant 0 : index
    %3 = memref.load %arg3[%c0_3] : memref<1xf32, #tpu.memory_space<smem>>
    %4 = vector.broadcast %3 : f32 to vector<1x256xf32>
    %5 = arith.addf %2, %4 : vector<1x256xf32>
    %cst_4 = arith.constant 0.000000e+00 : f32
    %6 = vector.broadcast %cst_4 : f32 to vector<1x256xf32>
    %7 = arith.minimumf %5, %6 : vector<1x256xf32>
    %c0_5 = arith.constant 0 : index
    %c0_6 = arith.constant 0 : index
    %8 = vector.load %arg4[%c0_5, %c0_6] : memref<1x256xf32, #tpu.memory_space<vmem>>, vector<1x256xf32>
    tpu.vector_store %arg4[%c0_5, %c0_6], %7 {strides = array<i32>} : memref<1x256xf32, #tpu.memory_space<vmem>>, vector<1x256xf32>,
    return
  }
  func.func @transform_0(%arg0: i32) -> (i32, i32) {
    %c0_i32 = arith.constant 0 : i32
    %c0_i32_0 = arith.constant 0 : i32
    return %arg0, %c0_i32 : i32, i32
  }
  func.func @transform_1(%arg0: i32) -> (i32, i32) {
    %c0_i32 = arith.constant 0 : i32
    %c0_i32_0 = arith.constant 0 : i32
    %c0_i32_1 = arith.constant 0 : i32
    return %c0_i32, %c0_i32_0 : i32, i32
  }
  func.func @transform_2(%arg0: i32) -> i32 {
    %c0_i32 = arith.constant 0 : i32
    %c0_i32_0 = arith.constant 0 : i32
    return %c0_i32 : i32
  }
  func.func @transform_3(%arg0: i32) -> (i32, i32) {
    %c0_i32 = arith.constant 0 : i32
    %c0_i32_0 = arith.constant 0 : i32
    return %c0_i32, %arg0 : i32, i32
  }
}

</mosaic_0001>

<llo_original>
// kernel: tpu_custom_call.1
$region0: #{tpu_custom_call.1}
  #allocation0 [shape = 'u32[]', space=smem, size = 0x4, offset = 0x4, fixed_abs, tag = 'smem constant byte address 0x4 - core index']
  #allocation1 [shape = 'u32[144,128]{1,0:T(1,128)}', space=vmem, size = 0x12000, scoped, tag = 'internal scratch']
  #allocation2 [shape = 'f32[1]{0:T(128)S(6)}', space=smem, size = 0x200, scoped, tag = 'scoped memory for tpu_custom_call.1']
  %s0 = inlined_call_operand.vmem [shape: f32[512,32], index: 0, kind: input, shape index: {}]
  %s1 = inlined_call_operand.vmem [shape: f32[1,32], index: 1, kind: input, shape index: {}]
  %s2 = inlined_call_operand.<no memory space> [shape: f32[1], index: 2, kind: input, shape index: {}]
  %s3 = inlined_call_operand.hbm [shape: f32[1,512], index: 3, kind: output, shape index: {}]
  %s4 = sld [smem:[#allocation0]]
  $region45: #{tpu_custom_call.1} parent=0
    _
  %s6 = ssub.s32 1, %s4
  %s7 = scalar_select 0, %s6, %s4
  %8 = sst [smem:[#allocation2]] %s2
  $region1: #{tpu_custom_call.1} parent=0
    #allocation3 [shape = 'u8[2048]{0}', space=vmem, size = 0x800, scoped, tag = 'output window, operand 0']
    #allocation4 [shape = 's32[2]{0}', space=sflag, size = 0x8, scoped, tag = 'scoped memory for tpu_custom_call.1']
    %9 = vsyncpa [#allocation4], 0
    %s10 = scalar_lea.sflag [#allocation4], 1
    %11 = vsyncpa %s10, 0
    loop: start=0, step=1, limit=4
    $region2: #{tpu_custom_call.1} parent=1 // loop_pre_header
      _
    $region3: #{tpu_custom_call.1} parent=1 // loop_header
      %s13 = sphi 0, %s17
      %p14 = scmp.ge.s32.totalorder %s13, 4
      %s23 = sphi 0, %s25
      %s26 = sphi 0, %s23
      %s27 = sphi 0, %s26
      %s43 = sphi 0, %s27
      %s47 = sphi 0, %s47
      %s49 = sphi 0, %s47
      %s50 = sphi 0, %s49
      %s64 = sphi 0, %s50
      %s68 = sphi 0, %s68
      %s70 = sphi 0, %s68
      %s71 = sphi 0, %s70
      %s85 = sphi 0, %s71
      %s91 = sphi 0, %s93
      %s94 = sphi 0, %s91
      %s95 = sphi 0, %s94
      %s111 = sphi 0, %s95
    $region4: #{tpu_custom_call.1} parent=1 // loop_header_branch
      %16 = sbr.rel (%p14) target = $region8
    $region5: #{tpu_custom_call.1} parent=1 // loop_body
      %s18 = ssub.s32 %s13, 1
      %s19 = ssub.s32 %s13, 2
      %s20 = sadd.s32 %s13, 1
      %s21 = ssub.s32 %s13, %s20
      %p22 = scmp.eq.s32.totalorder %s21, 0
      %s24 = sadd.s32 %s23, 1
      %s25 = scalar_select %p22, %s23, %s24
      %p28 = pneg %p22
      %p29 = scmp.eq.s32.totalorder %s13, 1
      %p30 = por %p28, %p29
      %p31 = scmp.ne.s32.totalorder %s23, %s26
      %p32 = scmp.eq.s32.totalorder %s13, 0
      %p33 = por %p31, %p32
      %p34 = scmp.ne.s32.totalorder %s23, %s26
      %p35 = scmp.eq.s32.totalorder %s18, 1
      %p36 = por %p34, %p35
      %p37 = scmp.ne.s32.totalorder %s26, %s27
      %p38 = scmp.eq.s32.totalorder %s18, 0
      %p39 = por %p37, %p38
      %p40 = scmp.ne.s32.totalorder %s26, %s27
      %p41 = scmp.eq.s32.totalorder %s19, 1
      %p42 = por %p40, %p41
      %p44 = scmp.ne.s32.totalorder %s27, %s43
      %p45 = scmp.eq.s32.totalorder %s19, 0
      %p46 = por %p44, %p45
      %s48 = sadd.s32 %s47, 1
      %p51 = scmp.eq.s32.totalorder %s13, 1
      %p52 = scmp.ne.s32.totalorder %s47, %s49
      %p53 = scmp.eq.s32.totalorder %s13, 0
      %p54 = por %p52, %p53
      %p55 = scmp.ne.s32.totalorder %s47, %s49
      %p56 = scmp.eq.s32.totalorder %s18, 1
      %p57 = por %p55, %p56
      %p58 = scmp.ne.s32.totalorder %s49, %s50
      %p59 = scmp.eq.s32.totalorder %s18, 0
      %p60 = por %p58, %p59
      %p61 = scmp.ne.s32.totalorder %s49, %s50
      %p62 = scmp.eq.s32.totalorder %s19, 1
      %p63 = por %p61, %p62
      %p65 = scmp.ne.s32.totalorder %s50, %s64
      %p66 = scmp.eq.s32.totalorder %s19, 0
      %p67 = por %p65, %p66
      %s69 = sadd.s32 %s68, 1
      %p72 = scmp.eq.s32.totalorder %s13, 1
      %p73 = scmp.ne.s32.totalorder %s68, %s70
      %p74 = scmp.eq.s32.totalorder %s13, 0
      %p75 = por %p73, %p74
      %p76 = scmp.ne.s32.totalorder %s68, %s70
      %p77 = scmp.eq.s32.totalorder %s18, 1
      %p78 = por %p76, %p77
      %p79 = scmp.ne.s32.totalorder %s70, %s71
      %p80 = scmp.eq.s32.totalorder %s18, 0
      %p81 = por %p79, %p80
      %p82 = scmp.ne.s32.totalorder %s70, %s71
      %p83 = scmp.eq.s32.totalorder %s19, 1
      %p84 = por %p82, %p83
      %p86 = scmp.ne.s32.totalorder %s71, %s85
      %p87 = scmp.eq.s32.totalorder %s19, 0
      %p88 = por %p86, %p87
      %s89 = ssub.s32 %s13, %s20
      %p90 = scmp.eq.s32.totalorder %s89, 0
      %s92 = sadd.s32 %s91, 1
      %s93 = scalar_select %p90, %s91, %s92
      %p96 = pneg %p90
      %p97 = scmp.eq.s32.totalorder %s13, 1
      %p98 = por %p96, %p97
      %p99 = scmp.ne.s32.totalorder %s91, %s94
      %p100 = scmp.eq.s32.totalorder %s13, 0
      %p101 = por %p99, %p100
      %p102 = scmp.ne.s32.totalorder %s91, %s94
      %p103 = scmp.eq.s32.totalorder %s18, 1
      %p104 = por %p102, %p103
      %p105 = scmp.ne.s32.totalorder %s94, %s95
      %p106 = scmp.eq.s32.totalorder %s18, 0
      %p107 = por %p105, %p106
      %p108 = scmp.ne.s32.totalorder %s94, %s95
      %p109 = scmp.eq.s32.totalorder %s19, 1
      %p110 = por %p108, %p109
      %p112 = scmp.ne.s32.totalorder %s95, %s111
      %p113 = scmp.eq.s32.totalorder %s19, 0
      %p114 = por %p112, %p113
      %p115 = scmp.le.s32.totalorder 1, %s13
      %p116 = scmp.lt.s32.totalorder %s13, 3
      %p117 = pnand %p115, %p116
      %p118 = pneg %p117
      // Predicated region
      $region9: #{tpu_custom_call.1} parent=5 // pred_check
        _
      $region10: #{tpu_custom_call.1} parent=5 // pred_check_branch
        %120 = sbr.rel (%p117) target = $region12
      $region11: #{tpu_custom_call.1} parent=5 // pred_region
        %s121 = ssub.s32 %s13, 1
        // Predicated region
        $region13: #{tpu_custom_call.1} parent=11 // pred_check
          %p122 = pneg %p60
        $region14: #{tpu_custom_call.1} parent=11 // pred_check_branch
          %124 = sbr.rel (%p122) target = $region16
        $region15: #{tpu_custom_call.1} parent=11 // pred_region
          _
        $region16: #{tpu_custom_call.1} parent=11 // pred_fallthru
          _
        // Predicated region
        $region17: #{tpu_custom_call.1} parent=11 // pred_check
          %p125 = pneg %p81
        $region18: #{tpu_custom_call.1} parent=11 // pred_check_branch
          %127 = sbr.rel (%p125) target = $region20
        $region19: #{tpu_custom_call.1} parent=11 // pred_region
          _
        $region20: #{tpu_custom_call.1} parent=11 // pred_fallthru
          _
      $region12: #{tpu_custom_call.1} parent=5 // pred_fallthru
        _
      %p128 = scmp.lt.s32.totalorder %s13, 2
      // Predicated region
      $region21: #{tpu_custom_call.1} parent=5 // pred_check
        %p129 = pneg %p128
      $region22: #{tpu_custom_call.1} parent=5 // pred_check_branch
        %131 = sbr.rel (%p129) target = $region24
      $region23: #{tpu_custom_call.1} parent=5 // pred_region
        // Predicated region
        $region25: #{tpu_custom_call.1} parent=23 // pred_check
          %p132 = pneg %p33
        $region26: #{tpu_custom_call.1} parent=23 // pred_check_branch
          %134 = sbr.rel (%p132) target = $region28
        $region27: #{tpu_custom_call.1} parent=23 // pred_region
          %s135 = smul.u32 32, %s13
          %p136 = scmp.lt.s32.totalorder %s135, 63
          %s137 = scalar_select %p136, %s135, 63
          %s138 = smul.addr %s137, 8
          %s139 = scalar_lea.vmem %s0, %s138
          %s140 = smul.u32 32, %s13
        $region28: #{tpu_custom_call.1} parent=23 // pred_fallthru
          _
      $region24: #{tpu_custom_call.1} parent=5 // pred_fallthru
        _
      %p141 = scmp.le.s32.totalorder 1, %s13
      %p142 = scmp.lt.s32.totalorder %s13, 3
      %p143 = pnand %p141, %p142
      %p144 = pneg %p143
      // Predicated region
      $region29: #{tpu_custom_call.1} parent=5 // pred_check
        _
      $region30: #{tpu_custom_call.1} parent=5 // pred_check_branch
        %146 = sbr.rel (%p143) target = $region32
      $region31: #{tpu_custom_call.1} parent=5 // pred_region
        %s147 = ssub.s32 %s13, 1
        %s148 = smul.u32 32, %s18
        %p149 = scmp.lt.s32.totalorder %s148, 63
        %s150 = scalar_select %p149, %s148, 63
        %s151 = smul.addr %s150, 8
        %s152 = scalar_lea.vmem %s0, %s151
        %p153 = pneg %p39
        %p154 = pneg %p36
        %p155 = pneg %p60
        %p156 = pneg %p57
        %p157 = pneg %p81
        %p158 = pneg %p78
        %p159 = pneg %p107
        %p160 = pneg %p104
        %s161 = sand.u32 %s94, 1
        %s162 = scalar_lea.sflag [#allocation4], %s161
        %s163 = sand.u32 %s94, 1
        %s164 = smul.addr %s163, 2
        %s165 = scalar_lea.vmem [#allocation3], %s164
        %s166 = smul.u32 32, %s18
        %p167 = scmp.lt.s32.totalorder %s166, 63
        %s168 = scalar_select %p167, %s166, 63
        %s169 = smul.addr %s168, 8
        %s170 = scalar_lea.vmem %s0, %s169
        %s171 = smul.u32 32, %s18
        %s172 = smul.u32 2, %s18
        %v173 = vld [vmem:[%s1] sm:$0x1]
        %v174 = vld [vmem:[%s170] sm:$0xff]
        %v175 = vld [vmem:[%s170 + $0x8] sm:$0xff]
        %v176 = vld [vmem:[%s170 + $0x10] sm:$0xff]
        %v177 = vld [vmem:[%s170 + $0x18] sm:$0xff]
        %v178 = vld [vmem:[%s170 + $0x20] sm:$0xff]
        %v179 = vld [vmem:[%s170 + $0x28] sm:$0xff]
        %v180 = vld [vmem:[%s170 + $0x30] sm:$0xff]
        %v181 = vld [vmem:[%s170 + $0x38] sm:$0xff]
        %v182 = vld [vmem:[%s170 + $0x40] sm:$0xff]
        %v183 = vld [vmem:[%s170 + $0x48] sm:$0xff]
        %v184 = vld [vmem:[%s170 + $0x50] sm:$0xff]
        %v185 = vld [vmem:[%s170 + $0x58] sm:$0xff]
        %v186 = vld [vmem:[%s170 + $0x60] sm:$0xff]
        %v187 = vld [vmem:[%s170 + $0x68] sm:$0xff]
        %v188 = vld [vmem:[%s170 + $0x70] sm:$0xff]
        %v189 = vld [vmem:[%s170 + $0x78] sm:$0xff]
        %v190 = vld [vmem:[%s170 + $0x80] sm:$0xff]
        %v191 = vld [vmem:[%s170 + $0x88] sm:$0xff]
        %v192 = vld [vmem:[%s170 + $0x90] sm:$0xff]
        %v193 = vld [vmem:[%s170 + $0x98] sm:$0xff]
        %v194 = vld [vmem:[%s170 + $0xa0] sm:$0xff]
        %v195 = vld [vmem:[%s170 + $0xa8] sm:$0xff]
        %v196 = vld [vmem:[%s170 + $0xb0] sm:$0xff]
        %v197 = vld [vmem:[%s170 + $0xb8] sm:$0xff]
        %v198 = vld [vmem:[%s170 + $0xc0] sm:$0xff]
        %v199 = vld [vmem:[%s170 + $0xc8] sm:$0xff]
        %v200 = vld [vmem:[%s170 + $0xd0] sm:$0xff]
        %v201 = vld [vmem:[%s170 + $0xd8] sm:$0xff]
        %v202 = vld [vmem:[%s170 + $0xe0] sm:$0xff]
        %v203 = vld [vmem:[%s170 + $0xe8] sm:$0xff]
        %v204 = vld [vmem:[%s170 + $0xf0] sm:$0xff]
        %v205 = vld [vmem:[%s170 + $0xf8] sm:$0xff]
        %s206 = sld [smem:[#allocation2]]
        %v207 = vstv %s206
        %vm208 = vcmask 261120
        %v210 = vsel %vm208, %v173, 0
        %v213 = vsel %vm208, %v174, 0
        %v216 = vsel %vm208, %v175, 0
        %v219 = vsel %vm208, %v176, 0
        %v222 = vsel %vm208, %v177, 0
        %v225 = vsel %vm208, %v178, 0
        %v228 = vsel %vm208, %v179, 0
        %v231 = vsel %vm208, %v180, 0
        %v234 = vsel %vm208, %v181, 0
        %v237 = vsel %vm208, %v182, 0
        %v240 = vsel %vm208, %v183, 0
        %v243 = vsel %vm208, %v184, 0
        %v246 = vsel %vm208, %v185, 0
        %v249 = vsel %vm208, %v186, 0
        %v252 = vsel %vm208, %v187, 0
        %v255 = vsel %vm208, %v188, 0
        %v258 = vsel %vm208, %v189, 0
        %v261 = vsel %vm208, %v190, 0
        %v264 = vsel %vm208, %v191, 0
        %v267 = vsel %vm208, %v192, 0
        %v270 = vsel %vm208, %v193, 0
        %v273 = vsel %vm208, %v194, 0
        %v276 = vsel %vm208, %v195, 0
        %v279 = vsel %vm208, %v196, 0
        %v282 = vsel %vm208, %v197, 0
        %v285 = vsel %vm208, %v198, 0
        %v288 = vsel %vm208, %v199, 0
        %v291 = vsel %vm208, %v200, 0
        %v294 = vsel %vm208, %v201, 0
        %v297 = vsel %vm208, %v202, 0
        %v300 = vsel %vm208, %v203, 0
        %v303 = vsel %vm208, %v204, 0
        %v306 = vsel %vm208, %v205, 0
        %308 = vmatprep.subr.mxu0 0.0
        %309 = vmatpush1.xpose.msra.mxu0 %v213
        %310 = vmatprep.subr.mxu0 0.0
        %311 = vmatpush1.xpose.msra.mxu0 %v216
        %312 = vmatprep.subr.mxu0 0.0
        %313 = vmatpush1.xpose.msra.mxu0 %v219
        %314 = vmatprep.subr.mxu0 0.0
        %315 = vmatpush1.xpose.msra.mxu0 %v222
        %316 = vmatprep.subr.mxu0 0.0
        %317 = vmatpush1.xpose.msra.mxu0 %v225
        %318 = vmatprep.subr.mxu0 0.0
        %319 = vmatpush1.xpose.msra.mxu0 %v228
        %320 = vmatprep.subr.mxu0 0.0
        %321 = vmatpush1.xpose.msra.mxu0 %v231
        %322 = vmatprep.subr.mxu0 0.0
        %323 = vmatpush1.xpose.msra.mxu0 %v234
        %324 = vmatprep.subr.mxu0 0.0
        %325 = vmatpush1.xpose.msra.mxu0 %v237
        %326 = vmatprep.subr.mxu0 0.0
        %327 = vmatpush1.xpose.msra.mxu0 %v240
        %328 = vmatprep.subr.mxu0 0.0
        %329 = vmatpush1.xpose.msra.mxu0 %v243
        %330 = vmatprep.subr.mxu0 0.0
        %331 = vmatpush1.xpose.msra.mxu0 %v246
        %332 = vmatprep.subr.mxu0 0.0
        %333 = vmatpush1.xpose.msra.mxu0 %v249
        %334 = vmatprep.subr.mxu0 0.0
        %335 = vmatpush1.xpose.msra.mxu0 %v252
        %336 = vmatprep.subr.mxu0 0.0
        %337 = vmatpush1.xpose.msra.mxu0 %v255
        %338 = vmatprep.subr.mxu0 0.0
        %339 = vmatpush1.xpose.msra.mxu0 %v258
        %340 = vmatprep.subr.mxu0 0.0
        %341 = vmatpush1.xpose.msra.mxu0 %v261
        %342 = vmatprep.subr.mxu0 0.0
        %343 = vmatpush1.xpose.msra.mxu0 %v264
        %344 = vmatprep.subr.mxu0 0.0
        %345 = vmatpush1.xpose.msra.mxu0 %v267
        %346 = vmatprep.subr.mxu0 0.0
        %347 = vmatpush1.xpose.msra.mxu0 %v270
        %348 = vmatprep.subr.mxu0 0.0
        %349 = vmatpush1.xpose.msra.mxu0 %v273
        %350 = vmatprep.subr.mxu0 0.0
        %351 = vmatpush1.xpose.msra.mxu0 %v276
        %352 = vmatprep.subr.mxu0 0.0
        %353 = vmatpush1.xpose.msra.mxu0 %v279
        %354 = vmatprep.subr.mxu0 0.0
        %355 = vmatpush1.xpose.msra.mxu0 %v282
        %356 = vmatprep.subr.mxu0 0.0
        %357 = vmatpush1.xpose.msra.mxu0 %v285
        %358 = vmatprep.subr.mxu0 0.0
        %359 = vmatpush1.xpose.msra.mxu0 %v288
        %360 = vmatprep.subr.mxu0 0.0
        %361 = vmatpush1.xpose.msra.mxu0 %v291
        %362 = vmatprep.subr.mxu0 0.0
        %363 = vmatpush1.xpose.msra.mxu0 %v294
        %364 = vmatprep.subr.mxu0 0.0
        %365 = vmatpush1.xpose.msra.mxu0 %v297
        %366 = vmatprep.subr.mxu0 0.0
        %367 = vmatpush1.xpose.msra.mxu0 %v300
        %368 = vmatprep.subr.mxu0 0.0
        %369 = vmatpush1.xpose.msra.mxu0 %v303
        %370 = vmatprep.subr.mxu0 0.0
        %371 = vmatpush1.xpose.msra.mxu0 %v306
        %372 = vmatprep.mubr.f32.mxu0 0.0
        %373 = vmatmul.mubr.f32.gmra.mrb[0].mxu0 %v210
        %v374 = vpop.f32.mrb[0].mxu0
        %v375 = vadd.f32 %v207, %v374
        %v376 = vpop.f32.mrb[0].mxu0
        %v377 = vadd.f32 %v207, %v376
        %378 = vdwg.mxu0
        %v379 = vmin.f32 %v375, 0.0
        %v380 = vmin.f32 %v377, 0.0
        %v383 = vcombine.low %v379, %v380
        %v385 = vunpack.c.l.s4 1966171168
        %v386 = vunpack.c.0.s8 %v385
        %v387 = vlaneseq
        %v388 = vshrl.u32 %v387, 7
        %v389 = vsub.s32 %v386, %v388
        %v390 = vrot.slane %v383, %v389
        %v392 = vunpack.c.l.s4 1966171168
        %v393 = vunpack.c.0.s8 %v392
        %v394 = vlaneseq
        %v395 = vshrl.u32 %v394, 7
        %v396 = vsub.s32 %v393, %v395
        %v397 = vrot.slane %v390, %v396
        %v399 = vlaneseq
        %vm400 = vcmp.ge.s32.totalorder %v399, 0
        %vm401 = vcmp.lt.s32.totalorder %v399, 256
        %vm402 = vmand %vm400, %vm401
        %403 = vst.msk [vmem:[%s165] sm:$0x3] %vm402, %v397
        %s404 = sand.u32 %s94, 1
        %s405 = scalar_lea.sflag [#allocation4], %s404
        %s406 = sand.u32 %s94, 1
        %s407 = smul.addr %s406, 2
        %s408 = scalar_lea.vmem [#allocation3], %s407
        // Predicated region
        $region33: #{tpu_custom_call.1} parent=31 // pred_check
          %p409 = pneg %p104
        $region34: #{tpu_custom_call.1} parent=31 // pred_check_branch
          %411 = sbr.rel (%p409) target = $region36
        $region35: #{tpu_custom_call.1} parent=31 // pred_region
          %s412 = smul.u32 2, %s18
          %s414 = ssub.s32 32, 32
          %415 = vsyncadd %s405, %s414
          %s416 = smul.addr %s412, 16
          %s417 = scalar_lea.hbm %s3, %s416
          %s419 = sshll.u32 %s408, 4
          %s420 = int_to_ptr.vmem [resolvable:$true] %s419
          %422 = dma.vmem_to_hbm [thread:$0]  %s420, 32, %s417, %s405
        $region36: #{tpu_custom_call.1} parent=31 // pred_fallthru
          _
      $region32: #{tpu_custom_call.1} parent=5 // pred_fallthru
        _
      %p423 = scmp.le.s32.totalorder 2, %s13
      // Predicated region
      $region37: #{tpu_custom_call.1} parent=5 // pred_check
        %p424 = pneg %p423
      $region38: #{tpu_custom_call.1} parent=5 // pred_check_branch
        %426 = sbr.rel (%p424) target = $region40
      $region39: #{tpu_custom_call.1} parent=5 // pred_region
        %s427 = ssub.s32 %s13, 2
        // Predicated region
        $region41: #{tpu_custom_call.1} parent=39 // pred_check
          %p428 = pneg %p110
        $region42: #{tpu_custom_call.1} parent=39 // pred_check_branch
          %430 = sbr.rel (%p428) target = $region44
        $region43: #{tpu_custom_call.1} parent=39 // pred_region
          %s431 = sand.u32 %s95, 1
          %s432 = scalar_lea.sflag [#allocation4], %s431
          %s433 = sand.u32 %s95, 1
          %s434 = smul.addr %s433, 2
          %s435 = scalar_lea.vmem [#allocation3], %s434
          %436 = dma.done %s432, 32
        $region44: #{tpu_custom_call.1} parent=39 // pred_fallthru
          _
      $region40: #{tpu_custom_call.1} parent=5 // pred_fallthru
        _
    $region6: #{tpu_custom_call.1} parent=1 // loop_footer
      %s17 = sadd.s32 1, %s13
    $region7: #{tpu_custom_call.1} parent=1 // loop_footer_branch
      %12 = sbr.rel target = $region3
    $region8: #{tpu_custom_call.1} parent=1 // loop_exit
      _
    %437 = vsyncpa [#allocation4], 1
    %s438 = scalar_lea.sflag [#allocation4], 1
    %439 = vsyncpa %s438, 1

</llo_original>
